<compile_context>
chip_gen: v7x
topology: tpu7x:2x2x1
jax: 0.10.0
libtpu: 0.0.40
codegen_flags: <defaults>
</compile_context>

<pallas_src>
import jax
import jax.numpy as jnp
from jax import lax
from jax.experimental import pallas as pl
from jax.experimental.pallas import tpu as pltpu


LANES = 128           # vreg lane width
PAIRS = LANES // 2    # 64 original (x0, x1) rows per packed 128-lane row
MAX_TILE_R = 1024     # packed rows per grid step (1024*128*4 B = 512 KiB/block)


def packed_affine_kernel(x_ref, m_ref, b_ref, o_ref):
    """o = x_packed @ kron(I_64, W_total) + bias_row, all lane-dense (.,128)."""
    acc = jnp.dot(
        x_ref[...], m_ref[...],
        preferred_element_type=jnp.float32,
        precision=lax.Precision.HIGHEST,   # exact-ish f32 on the MXU
    )
    o_ref[...] = (acc + b_ref[...]).astype(o_ref.dtype)


def precompose_params(params):
    """Fold the 6 Linear layers into one affine map (valid: no activations).

    params: list of (w_t, b) with w_t shaped (in, out), b shaped (1, out).
    Returns W_total (2, 2), b_total (1, 2).
    """
    w_total, b_total = params[0]
    for w_t, b in params[1:]:
        w_total = w_total @ w_t
        b_total = b_total @ w_t + b
    return w_total, b_total


def _round_up(n, m):
    return ((n + m - 1) // m) * m


def custom_model_forward(x, params):
    """x: (B, 2) float32.  params: list of (w_t (in,out), b (1,out)) pairs."""
    B, din = x.shape
    assert din == 2, "CustomModel input feature dim is 2"
    w_total, b_total = precompose_params(params)          # (2, 2), (1, 2)
    dout = w_total.shape[1]                                # 2

    # --- lane-packed view of the row-major (B, 2) data -----------------------
    B_round = _round_up(B, PAIRS)
    if B_round != B:
        # Tiny-tail fallback only when B % 64 != 0 (demo-sized inputs).
        # Large batches that are multiples of 64 take the zero-copy path.
        x = jnp.pad(x, ((0, B_round - B), (0, 0)))
    R = (B_round * din) // LANES                           # packed rows
    x_packed = x.reshape(R, LANES)                         # free row-major view

    # Block-diagonal matrix that applies W_total to every adjacent lane pair,
    # and the bias tiled across the 128 lanes.  Both stay resident in VMEM.
    m = jnp.kron(jnp.eye(PAIRS, dtype=jnp.float32), w_total)        # (128, 128)
    b_row = jnp.tile(b_total.reshape(1, dout), (1, PAIRS))           # (1, 128)

    # --- tile sizing ----------------------------------------------------------
    if R <= 8:
        tile_r = R                        # block dim == full array dim -> legal
    else:
        # big tiles, but keep >= ~16 grid steps for huge B (v7x megacore + pipeline)
        tile_r = min(MAX_TILE_R, max(8, _round_up(pl.cdiv(R, 16), 8)))
    grid = (pl.cdiv(R, tile_r),)          # ragged last block is masked by Pallas

    cost = pl.CostEstimate(
        flops=8 * B_round,                               # 2x2 affine per row
        transcendentals=0,
        bytes_accessed=B_round * (din + dout) * 4 + m.size * 4 + b_row.size * 4,
    )

    out_packed = pl.pallas_call(
        packed_affine_kernel,
        out_shape=jax.ShapeDtypeStruct((R, LANES), jnp.float32),
        grid=grid,
        in_specs=[
            pl.BlockSpec((tile_r, LANES), lambda i: (i, 0)),   # streaming x tiles
            pl.BlockSpec((LANES, LANES), lambda i: (0, 0)),    # kron(W) resident
            pl.BlockSpec((1, LANES), lambda i: (0, 0)),        # bias row resident
        ],
        out_specs=pl.BlockSpec((tile_r, LANES), lambda i: (i, 0)),
        compiler_params=pltpu.CompilerParams(
            dimension_semantics=("parallel",)),
        cost_estimate=cost,
    )(x_packed, m, b_row)

    out = out_packed.reshape(B_round, dout)                # free view back
    return out if B_round == B else out[:B]


def init_params(key):
    """Deterministic init mirroring the torch module's layer shapes.
    torch Linear(in, out) has weight (out, in), bias (out,); we store the
    transposed weight (in, out) and bias reshaped to (1, out)."""
    dims = [(2, 4), (4, 4), (4, 4), (4, 4), (4, 4), (4, 2)]
    params = []
    for (din, dout) in dims:
        key, kw, kb = jax.random.split(key, 3)
        bound = 1.0 / (din ** 0.5)
        w = jax.random.uniform(kw, (dout, din), jnp.float32, -bound, bound)
        b = jax.random.uniform(kb, (dout,), jnp.float32, -bound, bound)
        params.append((w.T, b.reshape(1, dout)))
    return params


def reference_forward(x, params):
    """Layer-by-layer reference matching the torch forward exactly."""
    h = x
    for w_t, b in params:
        h = h @ w_t + b
    return h


if __name__ == "__main__":
    key = jax.random.PRNGKey(0)
    kx, kp = jax.random.split(key)
    params = init_params(kp)

    fwd = jax.jit(custom_model_forward)

    # Small test-like batch (exercises the tail-pad fallback) and a larger
    # multiple-of-64 batch (exercises the zero-copy packed path with grid > 1).
    for B in (8, 2048):
        xb = jax.random.normal(jax.random.fold_in(kx, B), (B, 2), jnp.float32)
        out = jax.block_until_ready(fwd(xb, params))
        ref = reference_forward(xb, params)
        assert out.shape == (B, 2)
        assert jnp.allclose(out, ref, atol=1e-4, rtol=1e-4)

    print("KERNEL_OK")
</pallas_src>

<mosaic_0001>
module attributes {stable_mosaic.version = 11 : i64} {
  func.func @packed_affine_kernel(%arg0: i32, %arg1: memref<1x128xf32, #tpu.memory_space<vmem>>, %arg2: memref<128x128xf32, #tpu.memory_space<vmem>>, %arg3: memref<1x128xf32, #tpu.memory_space<vmem>>, %arg4: memref<1x128xf32, #tpu.memory_space<vmem>>) attributes {dimension_semantics = [#tpu.dimension_semantics<parallel>], iteration_bounds = array<i64: 1>, scalar_prefetch = 0 : i64, scratch_operands = 0 : i64, tpu.core_type = #tpu.core_type<tc>, window_params = [{transform_indices = @transform_0, window_bounds = array<i64: 1, 128>}, {pipeline_mode = #tpu.pipeline_mode<synchronous>, transform_indices = @transform_1, window_bounds = array<i64: 128, 128>}, {pipeline_mode = #tpu.pipeline_mode<synchronous>, transform_indices = @transform_2, window_bounds = array<i64: 1, 128>}, {transform_indices = @transform_3, window_bounds = array<i64: 1, 128>}]} {
    %c0 = arith.constant 0 : index
    %c0_0 = arith.constant 0 : index
    %0 = vector.load %arg1[%c0, %c0_0] : memref<1x128xf32, #tpu.memory_space<vmem>>, vector<1x128xf32>
    %c0_1 = arith.constant 0 : index
    %c0_2 = arith.constant 0 : index
    %1 = vector.load %arg2[%c0_1, %c0_2] : memref<128x128xf32, #tpu.memory_space<vmem>>, vector<128x128xf32>
    %cst = arith.constant dense<0.000000e+00> : vector<1x128xf32>
    %2 = tpu.matmul %0, %1, %cst {dimension_numbers = #tpu.dot_dimension_numbers<[1], [0], [0], [1], [0, 0, 1, 1], [], []>, precision = #tpu.contract_precision<fp32>} : vector<1x128xf32>, vector<128x128xf32>, vector<1x128xf32> -> vector<1x128xf32>
    %c0_3 = arith.constant 0 : index
    %c0_4 = arith.constant 0 : index
    %3 = vector.load %arg3[%c0_3, %c0_4] : memref<1x128xf32, #tpu.memory_space<vmem>>, vector<1x128xf32>
    %4 = arith.addf %2, %3 : vector<1x128xf32>
    %c0_5 = arith.constant 0 : index
    %c0_6 = arith.constant 0 : index
    %5 = vector.load %arg4[%c0_5, %c0_6] : memref<1x128xf32, #tpu.memory_space<vmem>>, vector<1x128xf32>
    tpu.vector_store %arg4[%c0_5, %c0_6], %4 {strides = array<i32>} : memref<1x128xf32, #tpu.memory_space<vmem>>, vector<1x128xf32>,
    return
  }
  func.func @transform_0(%arg0: i32) -> (i32, i32) {
    %c0_i32 = arith.constant 0 : i32
    %c0_i32_0 = arith.constant 0 : i32
    return %arg0, %c0_i32 : i32, i32
  }
  func.func @transform_1(%arg0: i32) -> (i32, i32) {
    %c0_i32 = arith.constant 0 : i32
    %c0_i32_0 = arith.constant 0 : i32
    %c0_i32_1 = arith.constant 0 : i32
    return %c0_i32, %c0_i32_0 : i32, i32
  }
  func.func @transform_2(%arg0: i32) -> (i32, i32) {
    %c0_i32 = arith.constant 0 : i32
    %c0_i32_0 = arith.constant 0 : i32
    %c0_i32_1 = arith.constant 0 : i32
    return %c0_i32, %c0_i32_0 : i32, i32
  }
  func.func @transform_3(%arg0: i32) -> (i32, i32) {
    %c0_i32 = arith.constant 0 : i32
    %c0_i32_0 = arith.constant 0 : i32
    return %arg0, %c0_i32 : i32, i32
  }
}

</mosaic_0001>

<llo_original>
// kernel: custom_model_forward.1
$region0: #{custom_model_forward.1}
  #allocation0 [shape = 'u32[]', space=smem, size = 0x4, offset = 0x4, fixed_abs, tag = 'smem constant byte address 0x4 - core index']
  #allocation1 [shape = 'u32[144,128]{1,0:T(1,128)}', space=vmem, size = 0x12000, scoped, tag = 'internal scratch']
  %s0 = inlined_call_operand.vmem [shape: f32[1,128], index: 0, kind: input, shape index: {}]
  %s1 = inlined_call_operand.vmem [shape: f32[128,128], index: 1, kind: input, shape index: {}]
  %s2 = inlined_call_operand.vmem [shape: f32[1,128], index: 2, kind: input, shape index: {}]
  %s3 = inlined_call_operand.vmem [shape: f32[1,128], index: 3, kind: output, shape index: {}]
  %s4 = sld [smem:[#allocation0]]
  $region22: #{custom_model_forward.1} parent=0
    _
  %s6 = ssub.s32 1, %s4
  %s7 = scalar_select 0, %s6, %s4
  // Predicated region
  $region2: #{custom_model_forward.1} parent=0 // pred_check
    _
  $region3: #{custom_model_forward.1} parent=0 // pred_check_branch
    %9 = sbr.rel (0) target = $region5
  $region4: #{custom_model_forward.1} parent=0 // pred_region
    _
  $region5: #{custom_model_forward.1} parent=0 // pred_fallthru
    _
  // Predicated region
  $region6: #{custom_model_forward.1} parent=0 // pred_check
    _
  $region7: #{custom_model_forward.1} parent=0 // pred_check_branch
    %11 = sbr.rel (0) target = $region9
  $region8: #{custom_model_forward.1} parent=0 // pred_region
    _
  $region9: #{custom_model_forward.1} parent=0 // pred_fallthru
    _
  // Predicated region
  $region10: #{custom_model_forward.1} parent=0 // pred_check
    _
  $region11: #{custom_model_forward.1} parent=0 // pred_check_branch
    %13 = sbr.rel (0) target = $region13
  $region12: #{custom_model_forward.1} parent=0 // pred_region
    _
  $region13: #{custom_model_forward.1} parent=0 // pred_fallthru
    _
  %v14 = vld [vmem:[%s0] sm:$0x1]
  %v15 = vld [vmem:[%s1] sm:$0xff]
  %v16 = vld [vmem:[%s1 + $0x8] sm:$0xff]
  %v17 = vld [vmem:[%s1 + $0x10] sm:$0xff]
  %v18 = vld [vmem:[%s1 + $0x18] sm:$0xff]
  %v19 = vld [vmem:[%s1 + $0x20] sm:$0xff]
  %v20 = vld [vmem:[%s1 + $0x28] sm:$0xff]
  %v21 = vld [vmem:[%s1 + $0x30] sm:$0xff]
  %v22 = vld [vmem:[%s1 + $0x38] sm:$0xff]
  %v23 = vld [vmem:[%s1 + $0x40] sm:$0xff]
  %v24 = vld [vmem:[%s1 + $0x48] sm:$0xff]
  %v25 = vld [vmem:[%s1 + $0x50] sm:$0xff]
  %v26 = vld [vmem:[%s1 + $0x58] sm:$0xff]
  %v27 = vld [vmem:[%s1 + $0x60] sm:$0xff]
  %v28 = vld [vmem:[%s1 + $0x68] sm:$0xff]
  %v29 = vld [vmem:[%s1 + $0x70] sm:$0xff]
  %v30 = vld [vmem:[%s1 + $0x78] sm:$0xff]
  %v31 = vld [vmem:[%s2] sm:$0x1]
  %32 = vmatprep.subr.mxu0 0.0
  %v33 = vand.u32 %v15, 4294901760
  %34 = vmatpush1.msra.mxu0 %v33
  %35 = vmatprep.subr.mxu0 0.0
  %v36 = vand.u32 %v16, 4294901760
  %37 = vmatpush1.msra.mxu0 %v36
  %38 = vmatprep.subr.mxu0 0.0
  %v39 = vand.u32 %v17, 4294901760
  %40 = vmatpush1.msra.mxu0 %v39
  %41 = vmatprep.subr.mxu0 0.0
  %v42 = vand.u32 %v18, 4294901760
  %43 = vmatpush1.msra.mxu0 %v42
  %44 = vmatprep.subr.mxu0 0.0
  %v45 = vand.u32 %v19, 4294901760
  %46 = vmatpush1.msra.mxu0 %v45
  %47 = vmatprep.subr.mxu0 0.0
  %v48 = vand.u32 %v20, 4294901760
  %49 = vmatpush1.msra.mxu0 %v48
  %50 = vmatprep.subr.mxu0 0.0
  %v51 = vand.u32 %v21, 4294901760
  %52 = vmatpush1.msra.mxu0 %v51
  %53 = vmatprep.subr.mxu0 0.0
  %v54 = vand.u32 %v22, 4294901760
  %55 = vmatpush1.msra.mxu0 %v54
  %56 = vmatprep.subr.mxu0 0.0
  %v57 = vand.u32 %v23, 4294901760
  %58 = vmatpush1.msra.mxu0 %v57
  %59 = vmatprep.subr.mxu0 0.0
  %v60 = vand.u32 %v24, 4294901760
  %61 = vmatpush1.msra.mxu0 %v60
  %62 = vmatprep.subr.mxu0 0.0
  %v63 = vand.u32 %v25, 4294901760
  %64 = vmatpush1.msra.mxu0 %v63
  %65 = vmatprep.subr.mxu0 0.0
  %v66 = vand.u32 %v26, 4294901760
  %67 = vmatpush1.msra.mxu0 %v66
  %68 = vmatprep.subr.mxu0 0.0
  %v69 = vand.u32 %v27, 4294901760
  %70 = vmatpush1.msra.mxu0 %v69
  %71 = vmatprep.subr.mxu0 0.0
  %v72 = vand.u32 %v28, 4294901760
  %73 = vmatpush1.msra.mxu0 %v72
  %74 = vmatprep.subr.mxu0 0.0
  %v75 = vand.u32 %v29, 4294901760
  %76 = vmatpush1.msra.mxu0 %v75
  %77 = vmatprep.subr.mxu0 0.0
  %v78 = vand.u32 %v30, 4294901760
  %79 = vmatpush1.msra.mxu0 %v78
  %80 = vmatprep.subr.mxu0 0.0
  %81 = vmatpush1.msra.mxu0 0.0
  %82 = vmatprep.subr.mxu0 0.0
  %83 = vmatpush1.msra.mxu0 0.0
  %84 = vmatprep.subr.mxu0 0.0
  %85 = vmatpush1.msra.mxu0 0.0
  %86 = vmatprep.subr.mxu0 0.0
  %87 = vmatpush1.msra.mxu0 0.0
  %88 = vmatprep.subr.mxu0 0.0
  %89 = vmatpush1.msra.mxu0 0.0
  %90 = vmatprep.subr.mxu0 0.0
  %91 = vmatpush1.msra.mxu0 0.0
  %92 = vmatprep.subr.mxu0 0.0
  %93 = vmatpush1.msra.mxu0 0.0
  %94 = vmatprep.subr.mxu0 0.0
  %95 = vmatpush1.msra.mxu0 0.0
  %96 = vmatprep.subr.mxu0 0.0
  %97 = vmatpush1.msra.mxu0 0.0
  %98 = vmatprep.subr.mxu0 0.0
  %99 = vmatpush1.msra.mxu0 0.0
  %100 = vmatprep.subr.mxu0 0.0
  %101 = vmatpush1.msra.mxu0 0.0
  %102 = vmatprep.subr.mxu0 0.0
  %103 = vmatpush1.msra.mxu0 0.0
  %104 = vmatprep.subr.mxu0 0.0
  %105 = vmatpush1.msra.mxu0 0.0
  %106 = vmatprep.subr.mxu0 0.0
  %107 = vmatpush1.msra.mxu0 0.0
  %108 = vmatprep.subr.mxu0 0.0
  %109 = vmatpush1.msra.mxu0 0.0
  %110 = vmatprep.subr.mxu0 0.0
  %111 = vmatpush1.msra.mxu0 0.0
  %112 = vmatprep.mubr.f32.mxu0 0.0
  %v113 = vand.u32 %v14, 4294901760
  %v114 = vsub.f32 %v14, %v113
  %v115 = vand.u32 %v114, 4294901760
  %v116 = vsub.f32 %v114, %v115
  %v117 = vand.u32 %v116, 4294901760
  %118 = vmatmul.mubr.f32.gmra.mrb[0].mxu0 %v117
  %v119 = vpop.f32.mrb[0].mxu0
  %v120 = vadd.f32 %v31, %v119
  %v121 = vpop.f32.mrb[0].mxu0
  %122 = vdwg.mxu0
  %123 = vmatprep.subr.mxu0 0.0
  %v124 = vand.u32 %v15, 4294901760
  %v125 = vsub.f32 %v15, %v124
  %v126 = vand.u32 %v125, 4294901760
  %v127 = vsub.f32 %v125, %v126
  %v128 = vand.u32 %v127, 4294901760
  %129 = vmatpush1.msra.mxu0 %v128
  %130 = vmatprep.subr.mxu0 0.0
  %v131 = vand.u32 %v16, 4294901760
  %v132 = vsub.f32 %v16, %v131
  %v133 = vand.u32 %v132, 4294901760
  %v134 = vsub.f32 %v132, %v133
  %v135 = vand.u32 %v134, 4294901760
  %136 = vmatpush1.msra.mxu0 %v135
  %137 = vmatprep.subr.mxu0 0.0
  %v138 = vand.u32 %v17, 4294901760
  %v139 = vsub.f32 %v17, %v138
  %v140 = vand.u32 %v139, 4294901760
  %v141 = vsub.f32 %v139, %v140
  %v142 = vand.u32 %v141, 4294901760
  %143 = vmatpush1.msra.mxu0 %v142
  %144 = vmatprep.subr.mxu0 0.0
  %v145 = vand.u32 %v18, 4294901760
  %v146 = vsub.f32 %v18, %v145
  %v147 = vand.u32 %v146, 4294901760
  %v148 = vsub.f32 %v146, %v147
  %v149 = vand.u32 %v148, 4294901760
  %150 = vmatpush1.msra.mxu0 %v149
  %151 = vmatprep.subr.mxu0 0.0
  %v152 = vand.u32 %v19, 4294901760
  %v153 = vsub.f32 %v19, %v152
  %v154 = vand.u32 %v153, 4294901760
  %v155 = vsub.f32 %v153, %v154
  %v156 = vand.u32 %v155, 4294901760
  %157 = vmatpush1.msra.mxu0 %v156
  %158 = vmatprep.subr.mxu0 0.0
  %v159 = vand.u32 %v20, 4294901760
  %v160 = vsub.f32 %v20, %v159
  %v161 = vand.u32 %v160, 4294901760
  %v162 = vsub.f32 %v160, %v161
  %v163 = vand.u32 %v162, 4294901760
  %164 = vmatpush1.msra.mxu0 %v163
  %165 = vmatprep.subr.mxu0 0.0
  %v166 = vand.u32 %v21, 4294901760
  %v167 = vsub.f32 %v21, %v166
  %v168 = vand.u32 %v167, 4294901760
  %v169 = vsub.f32 %v167, %v168
  %v170 = vand.u32 %v169, 4294901760
  %171 = vmatpush1.msra.mxu0 %v170
  %172 = vmatprep.subr.mxu0 0.0
  %v173 = vand.u32 %v22, 4294901760
  %v174 = vsub.f32 %v22, %v173
  %v175 = vand.u32 %v174, 4294901760
  %v176 = vsub.f32 %v174, %v175
  %v177 = vand.u32 %v176, 4294901760
  %178 = vmatpush1.msra.mxu0 %v177
  %179 = vmatprep.subr.mxu0 0.0
  %v180 = vand.u32 %v23, 4294901760
  %v181 = vsub.f32 %v23, %v180
  %v182 = vand.u32 %v181, 4294901760
  %v183 = vsub.f32 %v181, %v182
  %v184 = vand.u32 %v183, 4294901760
  %185 = vmatpush1.msra.mxu0 %v184
  %186 = vmatprep.subr.mxu0 0.0
  %v187 = vand.u32 %v24, 4294901760
  %v188 = vsub.f32 %v24, %v187
  %v189 = vand.u32 %v188, 4294901760
  %v190 = vsub.f32 %v188, %v189
  %v191 = vand.u32 %v190, 4294901760
  %192 = vmatpush1.msra.mxu0 %v191
  %193 = vmatprep.subr.mxu0 0.0
  %v194 = vand.u32 %v25, 4294901760
  %v195 = vsub.f32 %v25, %v194
  %v196 = vand.u32 %v195, 4294901760
  %v197 = vsub.f32 %v195, %v196
  %v198 = vand.u32 %v197, 4294901760
  %199 = vmatpush1.msra.mxu0 %v198
  %200 = vmatprep.subr.mxu0 0.0
  %v201 = vand.u32 %v26, 4294901760
  %v202 = vsub.f32 %v26, %v201
  %v203 = vand.u32 %v202, 4294901760
  %v204 = vsub.f32 %v202, %v203
  %v205 = vand.u32 %v204, 4294901760
  %206 = vmatpush1.msra.mxu0 %v205
  %207 = vmatprep.subr.mxu0 0.0
  %v208 = vand.u32 %v27, 4294901760
  %v209 = vsub.f32 %v27, %v208
  %v210 = vand.u32 %v209, 4294901760
  %v211 = vsub.f32 %v209, %v210
  %v212 = vand.u32 %v211, 4294901760
  %213 = vmatpush1.msra.mxu0 %v212
  %214 = vmatprep.subr.mxu0 0.0
  %v215 = vand.u32 %v28, 4294901760
  %v216 = vsub.f32 %v28, %v215
  %v217 = vand.u32 %v216, 4294901760
  %v218 = vsub.f32 %v216, %v217
  %v219 = vand.u32 %v218, 4294901760
  %220 = vmatpush1.msra.mxu0 %v219
  %221 = vmatprep.subr.mxu0 0.0
  %v222 = vand.u32 %v29, 4294901760
  %v223 = vsub.f32 %v29, %v222
  %v224 = vand.u32 %v223, 4294901760
  %v225 = vsub.f32 %v223, %v224
  %v226 = vand.u32 %v225, 4294901760
  %227 = vmatpush1.msra.mxu0 %v226
  %228 = vmatprep.subr.mxu0 0.0
  %v229 = vand.u32 %v30, 4294901760
  %v230 = vsub.f32 %v30, %v229
  %v231 = vand.u32 %v230, 4294901760
  %v232 = vsub.f32 %v230, %v231
  %v233 = vand.u32 %v232, 4294901760
  %234 = vmatpush1.msra.mxu0 %v233
  %235 = vmatprep.subr.mxu0 0.0
  %236 = vmatpush1.msra.mxu0 0.0
  %237 = vmatprep.subr.mxu0 0.0
  %238 = vmatpush1.msra.mxu0 0.0
  %239 = vmatprep.subr.mxu0 0.0
  %240 = vmatpush1.msra.mxu0 0.0
  %241 = vmatprep.subr.mxu0 0.0
  %242 = vmatpush1.msra.mxu0 0.0
  %243 = vmatprep.subr.mxu0 0.0
  %244 = vmatpush1.msra.mxu0 0.0
  %245 = vmatprep.subr.mxu0 0.0
  %246 = vmatpush1.msra.mxu0 0.0
  %247 = vmatprep.subr.mxu0 0.0
  %248 = vmatpush1.msra.mxu0 0.0
  %249 = vmatprep.subr.mxu0 0.0
  %250 = vmatpush1.msra.mxu0 0.0
  %251 = vmatprep.subr.mxu0 0.0
  %252 = vmatpush1.msra.mxu0 0.0
  %253 = vmatprep.subr.mxu0 0.0
  %254 = vmatpush1.msra.mxu0 0.0
  %255 = vmatprep.subr.mxu0 0.0
  %256 = vmatpush1.msra.mxu0 0.0
  %257 = vmatprep.subr.mxu0 0.0
  %258 = vmatpush1.msra.mxu0 0.0
  %259 = vmatprep.subr.mxu0 0.0
  %260 = vmatpush1.msra.mxu0 0.0
  %261 = vmatprep.subr.mxu0 0.0
  %262 = vmatpush1.msra.mxu0 0.0
  %263 = vmatprep.subr.mxu0 0.0
  %264 = vmatpush1.msra.mxu0 0.0
  %265 = vmatprep.subr.mxu0 0.0
  %266 = vmatpush1.msra.mxu0 0.0
  %267 = vmatprep.mubr.f32.mxu0 0.0
  %v268 = vand.u32 %v14, 4294901760
  %269 = vmatmul.mubr.f32.gmra.mrb[0].mxu0 %v268
  %v270 = vpop.f32.mrb[0].mxu0
  %v271 = vadd.f32 %v120, %v270
  %v272 = vpop.f32.mrb[0].mxu0
  %273 = vdwg.mxu0
  %274 = vmatprep.subr.mxu0 0.0
  %v275 = vand.u32 %v15, 4294901760
  %v276 = vsub.f32 %v15, %v275
  %277 = vmatpush1.msra.mxu0 %v276
  %278 = vmatprep.subr.mxu0 0.0
  %v279 = vand.u32 %v16, 4294901760
  %v280 = vsub.f32 %v16, %v279
  %281 = vmatpush1.msra.mxu0 %v280
  %282 = vmatprep.subr.mxu0 0.0
  %v283 = vand.u32 %v17, 4294901760
  %v284 = vsub.f32 %v17, %v283
  %285 = vmatpush1.msra.mxu0 %v284
  %286 = vmatprep.subr.mxu0 0.0
  %v287 = vand.u32 %v18, 4294901760
  %v288 = vsub.f32 %v18, %v287
  %289 = vmatpush1.msra.mxu0 %v288
  %290 = vmatprep.subr.mxu0 0.0
  %v291 = vand.u32 %v19, 4294901760
  %v292 = vsub.f32 %v19, %v291
  %293 = vmatpush1.msra.mxu0 %v292
  %294 = vmatprep.subr.mxu0 0.0
  %v295 = vand.u32 %v20, 4294901760
  %v296 = vsub.f32 %v20, %v295
  %297 = vmatpush1.msra.mxu0 %v296
  %298 = vmatprep.subr.mxu0 0.0
  %v299 = vand.u32 %v21, 4294901760
  %v300 = vsub.f32 %v21, %v299
  %301 = vmatpush1.msra.mxu0 %v300
  %302 = vmatprep.subr.mxu0 0.0
  %v303 = vand.u32 %v22, 4294901760
  %v304 = vsub.f32 %v22, %v303
  %305 = vmatpush1.msra.mxu0 %v304
  %306 = vmatprep.subr.mxu0 0.0
  %v307 = vand.u32 %v23, 4294901760
  %v308 = vsub.f32 %v23, %v307
  %309 = vmatpush1.msra.mxu0 %v308
  %310 = vmatprep.subr.mxu0 0.0
  %v311 = vand.u32 %v24, 4294901760
  %v312 = vsub.f32 %v24, %v311
  %313 = vmatpush1.msra.mxu0 %v312
  %314 = vmatprep.subr.mxu0 0.0
  %v315 = vand.u32 %v25, 4294901760
  %v316 = vsub.f32 %v25, %v315
  %317 = vmatpush1.msra.mxu0 %v316
  %318 = vmatprep.subr.mxu0 0.0
  %v319 = vand.u32 %v26, 4294901760
  %v320 = vsub.f32 %v26, %v319
  %321 = vmatpush1.msra.mxu0 %v320
  %322 = vmatprep.subr.mxu0 0.0
  %v323 = vand.u32 %v27, 4294901760
  %v324 = vsub.f32 %v27, %v323
  %325 = vmatpush1.msra.mxu0 %v324
  %326 = vmatprep.subr.mxu0 0.0
  %v327 = vand.u32 %v28, 4294901760
  %v328 = vsub.f32 %v28, %v327
  %329 = vmatpush1.msra.mxu0 %v328
  %330 = vmatprep.subr.mxu0 0.0
  %v331 = vand.u32 %v29, 4294901760
  %v332 = vsub.f32 %v29, %v331
  %333 = vmatpush1.msra.mxu0 %v332
  %334 = vmatprep.subr.mxu0 0.0
  %v335 = vand.u32 %v30, 4294901760
  %v336 = vsub.f32 %v30, %v335
  %337 = vmatpush1.msra.mxu0 %v336
  %338 = vmatprep.subr.mxu0 0.0
  %339 = vmatpush1.msra.mxu0 0.0
  %340 = vmatprep.subr.mxu0 0.0
  %341 = vmatpush1.msra.mxu0 0.0
  %342 = vmatprep.subr.mxu0 0.0
  %343 = vmatpush1.msra.mxu0 0.0
  %344 = vmatprep.subr.mxu0 0.0
  %345 = vmatpush1.msra.mxu0 0.0
  %346 = vmatprep.subr.mxu0 0.0
  %347 = vmatpush1.msra.mxu0 0.0
  %348 = vmatprep.subr.mxu0 0.0
  %349 = vmatpush1.msra.mxu0 0.0
  %350 = vmatprep.subr.mxu0 0.0
  %351 = vmatpush1.msra.mxu0 0.0
  %352 = vmatprep.subr.mxu0 0.0
  %353 = vmatpush1.msra.mxu0 0.0
  %354 = vmatprep.subr.mxu0 0.0
  %355 = vmatpush1.msra.mxu0 0.0
  %356 = vmatprep.subr.mxu0 0.0
  %357 = vmatpush1.msra.mxu0 0.0
  %358 = vmatprep.subr.mxu0 0.0
  %359 = vmatpush1.msra.mxu0 0.0
  %360 = vmatprep.subr.mxu0 0.0
  %361 = vmatpush1.msra.mxu0 0.0
  %362 = vmatprep.subr.mxu0 0.0
  %363 = vmatpush1.msra.mxu0 0.0
  %364 = vmatprep.subr.mxu0 0.0
  %365 = vmatpush1.msra.mxu0 0.0
  %366 = vmatprep.subr.mxu0 0.0
  %367 = vmatpush1.msra.mxu0 0.0
  %368 = vmatprep.subr.mxu0 0.0
  %369 = vmatpush1.msra.mxu0 0.0
  %370 = vmatprep.mubr.f32.mxu0 0.0
  %v371 = vand.u32 %v14, 4294901760
  %v372 = vsub.f32 %v14, %v371
  %373 = vmatmul.mubr.f32.gmra.mrb[0].mxu0 %v372
  %v374 = vpop.f32.mrb[0].mxu0
  %v375 = vadd.f32 %v271, %v374
  %v376 = vpop.f32.mrb[0].mxu0
  %377 = vdwg.mxu0
  %378 = vmatprep.subr.mxu0 0.0
  %v379 = vand.u32 %v15, 4294901760
  %380 = vmatpush1.msra.mxu0 %v379
  %381 = vmatprep.subr.mxu0 0.0
  %v382 = vand.u32 %v16, 4294901760
  %383 = vmatpush1.msra.mxu0 %v382
  %384 = vmatprep.subr.mxu0 0.0
  %v385 = vand.u32 %v17, 4294901760
  %386 = vmatpush1.msra.mxu0 %v385
  %387 = vmatprep.subr.mxu0 0.0
  %v388 = vand.u32 %v18, 4294901760
  %389 = vmatpush1.msra.mxu0 %v388
  %390 = vmatprep.subr.mxu0 0.0
  %v391 = vand.u32 %v19, 4294901760
  %392 = vmatpush1.msra.mxu0 %v391
  %393 = vmatprep.subr.mxu0 0.0
  %v394 = vand.u32 %v20, 4294901760
  %395 = vmatpush1.msra.mxu0 %v394
  %396 = vmatprep.subr.mxu0 0.0
  %v397 = vand.u32 %v21, 4294901760
  %398 = vmatpush1.msra.mxu0 %v397
  %399 = vmatprep.subr.mxu0 0.0
  %v400 = vand.u32 %v22, 4294901760
  %401 = vmatpush1.msra.mxu0 %v400
  %402 = vmatprep.subr.mxu0 0.0
  %v403 = vand.u32 %v23, 4294901760
  %404 = vmatpush1.msra.mxu0 %v403
  %405 = vmatprep.subr.mxu0 0.0
  %v406 = vand.u32 %v24, 4294901760
  %407 = vmatpush1.msra.mxu0 %v406
  %408 = vmatprep.subr.mxu0 0.0
  %v409 = vand.u32 %v25, 4294901760
  %410 = vmatpush1.msra.mxu0 %v409
  %411 = vmatprep.subr.mxu0 0.0
  %v412 = vand.u32 %v26, 4294901760
  %413 = vmatpush1.msra.mxu0 %v412
  %414 = vmatprep.subr.mxu0 0.0
  %v415 = vand.u32 %v27, 4294901760
  %416 = vmatpush1.msra.mxu0 %v415
  %417 = vmatprep.subr.mxu0 0.0
  %v418 = vand.u32 %v28, 4294901760
  %419 = vmatpush1.msra.mxu0 %v418
  %420 = vmatprep.subr.mxu0 0.0
  %v421 = vand.u32 %v29, 4294901760
  %422 = vmatpush1.msra.mxu0 %v421
  %423 = vmatprep.subr.mxu0 0.0
  %v424 = vand.u32 %v30, 4294901760
  %425 = vmatpush1.msra.mxu0 %v424
  %426 = vmatprep.subr.mxu0 0.0
  %427 = vmatpush1.msra.mxu0 0.0
  %428 = vmatprep.subr.mxu0 0.0
  %429 = vmatpush1.msra.mxu0 0.0
  %430 = vmatprep.subr.mxu0 0.0
  %431 = vmatpush1.msra.mxu0 0.0
  %432 = vmatprep.subr.mxu0 0.0
  %433 = vmatpush1.msra.mxu0 0.0
  %434 = vmatprep.subr.mxu0 0.0
  %435 = vmatpush1.msra.mxu0 0.0
  %436 = vmatprep.subr.mxu0 0.0
  %437 = vmatpush1.msra.mxu0 0.0
  %438 = vmatprep.subr.mxu0 0.0
  %439 = vmatpush1.msra.mxu0 0.0
  %440 = vmatprep.subr.mxu0 0.0
  %441 = vmatpush1.msra.mxu0 0.0
  %442 = vmatprep.subr.mxu0 0.0
  %443 = vmatpush1.msra.mxu0 0.0
  %444 = vmatprep.subr.mxu0 0.0
  %445 = vmatpush1.msra.mxu0 0.0
  %446 = vmatprep.subr.mxu0 0.0
  %447 = vmatpush1.msra.mxu0 0.0
  %448 = vmatprep.subr.mxu0 0.0
  %449 = vmatpush1.msra.mxu0 0.0
  %450 = vmatprep.subr.mxu0 0.0
  %451 = vmatpush1.msra.mxu0 0.0
  %452 = vmatprep.subr.mxu0 0.0
  %453 = vmatpush1.msra.mxu0 0.0
  %454 = vmatprep.subr.mxu0 0.0
  %455 = vmatpush1.msra.mxu0 0.0
  %456 = vmatprep.subr.mxu0 0.0
  %457 = vmatpush1.msra.mxu0 0.0
  %458 = vmatprep.mubr.f32.mxu0 0.0
  %v459 = vand.u32 %v14, 4294901760
  %v460 = vsub.f32 %v14, %v459
  %v461 = vand.u32 %v460, 4294901760
  %462 = vmatmul.mubr.f32.gmra.mrb[0].mxu0 %v461
  %v463 = vpop.f32.mrb[0].mxu0
  %v464 = vadd.f32 %v375, %v463
  %v465 = vpop.f32.mrb[0].mxu0
  %466 = vdwg.mxu0
  %467 = vmatprep.subr.mxu0 0.0
  %v468 = vand.u32 %v15, 4294901760
  %v469 = vsub.f32 %v15, %v468
  %v470 = vand.u32 %v469, 4294901760
  %471 = vmatpush1.msra.mxu0 %v470
  %472 = vmatprep.subr.mxu0 0.0
  %v473 = vand.u32 %v16, 4294901760
  %v474 = vsub.f32 %v16, %v473
  %v475 = vand.u32 %v474, 4294901760
  %476 = vmatpush1.msra.mxu0 %v475
  %477 = vmatprep.subr.mxu0 0.0
  %v478 = vand.u32 %v17, 4294901760
  %v479 = vsub.f32 %v17, %v478
  %v480 = vand.u32 %v479, 4294901760
  %481 = vmatpush1.msra.mxu0 %v480
  %482 = vmatprep.subr.mxu0 0.0
  %v483 = vand.u32 %v18, 4294901760
  %v484 = vsub.f32 %v18, %v483
  %v485 = vand.u32 %v484, 4294901760
  %486 = vmatpush1.msra.mxu0 %v485
  %487 = vmatprep.subr.mxu0 0.0
  %v488 = vand.u32 %v19, 4294901760
  %v489 = vsub.f32 %v19, %v488
  %v490 = vand.u32 %v489, 4294901760
  %491 = vmatpush1.msra.mxu0 %v490
  %492 = vmatprep.subr.mxu0 0.0
  %v493 = vand.u32 %v20, 4294901760
  %v494 = vsub.f32 %v20, %v493
  %v495 = vand.u32 %v494, 4294901760
  %496 = vmatpush1.msra.mxu0 %v495
  %497 = vmatprep.subr.mxu0 0.0
  %v498 = vand.u32 %v21, 4294901760
  %v499 = vsub.f32 %v21, %v498
  %v500 = vand.u32 %v499, 4294901760
  %501 = vmatpush1.msra.mxu0 %v500
  %502 = vmatprep.subr.mxu0 0.0
  %v503 = vand.u32 %v22, 4294901760
  %v504 = vsub.f32 %v22, %v503
  %v505 = vand.u32 %v504, 4294901760
  %506 = vmatpush1.msra.mxu0 %v505
  %507 = vmatprep.subr.mxu0 0.0
  %v508 = vand.u32 %v23, 4294901760
  %v509 = vsub.f32 %v23, %v508
  %v510 = vand.u32 %v509, 4294901760
  %511 = vmatpush1.msra.mxu0 %v510
  %512 = vmatprep.subr.mxu0 0.0
  %v513 = vand.u32 %v24, 4294901760
  %v514 = vsub.f32 %v24, %v513
  %v515 = vand.u32 %v514, 4294901760
  %516 = vmatpush1.msra.mxu0 %v515
  %517 = vmatprep.subr.mxu0 0.0
  %v518 = vand.u32 %v25, 4294901760
  %v519 = vsub.f32 %v25, %v518
  %v520 = vand.u32 %v519, 4294901760
  %521 = vmatpush1.msra.mxu0 %v520
  %522 = vmatprep.subr.mxu0 0.0
  %v523 = vand.u32 %v26, 4294901760
  %v524 = vsub.f32 %v26, %v523
  %v525 = vand.u32 %v524, 4294901760
  %526 = vmatpush1.msra.mxu0 %v525
  %527 = vmatprep.subr.mxu0 0.0
  %v528 = vand.u32 %v27, 4294901760
  %v529 = vsub.f32 %v27, %v528
  %v530 = vand.u32 %v529, 4294901760
  %531 = vmatpush1.msra.mxu0 %v530
  %532 = vmatprep.subr.mxu0 0.0
  %v533 = vand.u32 %v28, 4294901760
  %v534 = vsub.f32 %v28, %v533
  %v535 = vand.u32 %v534, 4294901760
  %536 = vmatpush1.msra.mxu0 %v535
  %537 = vmatprep.subr.mxu0 0.0
  %v538 = vand.u32 %v29, 4294901760
  %v539 = vsub.f32 %v29, %v538
  %v540 = vand.u32 %v539, 4294901760
  %541 = vmatpush1.msra.mxu0 %v540
  %542 = vmatprep.subr.mxu0 0.0
  %v543 = vand.u32 %v30, 4294901760
  %v544 = vsub.f32 %v30, %v543
  %v545 = vand.u32 %v544, 4294901760
  %546 = vmatpush1.msra.mxu0 %v545
  %547 = vmatprep.subr.mxu0 0.0
  %548 = vmatpush1.msra.mxu0 0.0
  %549 = vmatprep.subr.mxu0 0.0
  %550 = vmatpush1.msra.mxu0 0.0
  %551 = vmatprep.subr.mxu0 0.0
  %552 = vmatpush1.msra.mxu0 0.0
  %553 = vmatprep.subr.mxu0 0.0
  %554 = vmatpush1.msra.mxu0 0.0
  %555 = vmatprep.subr.mxu0 0.0
  %556 = vmatpush1.msra.mxu0 0.0
  %557 = vmatprep.subr.mxu0 0.0
  %558 = vmatpush1.msra.mxu0 0.0
  %559 = vmatprep.subr.mxu0 0.0
  %560 = vmatpush1.msra.mxu0 0.0
  %561 = vmatprep.subr.mxu0 0.0
  %562 = vmatpush1.msra.mxu0 0.0
  %563 = vmatprep.subr.mxu0 0.0
  %564 = vmatpush1.msra.mxu0 0.0
  %565 = vmatprep.subr.mxu0 0.0
  %566 = vmatpush1.msra.mxu0 0.0
  %567 = vmatprep.subr.mxu0 0.0
  %568 = vmatpush1.msra.mxu0 0.0
  %569 = vmatprep.subr.mxu0 0.0
  %570 = vmatpush1.msra.mxu0 0.0
  %571 = vmatprep.subr.mxu0 0.0
  %572 = vmatpush1.msra.mxu0 0.0
  %573 = vmatprep.subr.mxu0 0.0
  %574 = vmatpush1.msra.mxu0 0.0
  %575 = vmatprep.subr.mxu0 0.0
  %576 = vmatpush1.msra.mxu0 0.0
  %577 = vmatprep.subr.mxu0 0.0
  %578 = vmatpush1.msra.mxu0 0.0
  %579 = vmatprep.mubr.f32.mxu0 0.0
  %v580 = vand.u32 %v14, 4294901760
  %581 = vmatmul.mubr.f32.gmra.mrb[0].mxu0 %v580
  %v582 = vpop.f32.mrb[0].mxu0
  %v583 = vadd.f32 %v464, %v582
  %v584 = vpop.f32.mrb[0].mxu0
  %585 = vdwg.mxu0
  %586 = vmatprep.subr.mxu0 0.0
  %v587 = vand.u32 %v15, 4294901760
  %588 = vmatpush1.msra.mxu0 %v587
  %589 = vmatprep.subr.mxu0 0.0
  %v590 = vand.u32 %v16, 4294901760
  %591 = vmatpush1.msra.mxu0 %v590
  %592 = vmatprep.subr.mxu0 0.0
  %v593 = vand.u32 %v17, 4294901760
  %594 = vmatpush1.msra.mxu0 %v593
  %595 = vmatprep.subr.mxu0 0.0
  %v596 = vand.u32 %v18, 4294901760
  %597 = vmatpush1.msra.mxu0 %v596
  %598 = vmatprep.subr.mxu0 0.0
  %v599 = vand.u32 %v19, 4294901760
  %600 = vmatpush1.msra.mxu0 %v599
  %601 = vmatprep.subr.mxu0 0.0
  %v602 = vand.u32 %v20, 4294901760
  %603 = vmatpush1.msra.mxu0 %v602
  %604 = vmatprep.subr.mxu0 0.0
  %v605 = vand.u32 %v21, 4294901760
  %606 = vmatpush1.msra.mxu0 %v605
  %607 = vmatprep.subr.mxu0 0.0
  %v608 = vand.u32 %v22, 4294901760
  %609 = vmatpush1.msra.mxu0 %v608
  %610 = vmatprep.subr.mxu0 0.0
  %v611 = vand.u32 %v23, 4294901760
  %612 = vmatpush1.msra.mxu0 %v611
  %613 = vmatprep.subr.mxu0 0.0
  %v614 = vand.u32 %v24, 4294901760
  %615 = vmatpush1.msra.mxu0 %v614
  %616 = vmatprep.subr.mxu0 0.0
  %v617 = vand.u32 %v25, 4294901760
  %618 = vmatpush1.msra.mxu0 %v617
  %619 = vmatprep.subr.mxu0 0.0
  %v620 = vand.u32 %v26, 4294901760
  %621 = vmatpush1.msra.mxu0 %v620
  %622 = vmatprep.subr.mxu0 0.0
  %v623 = vand.u32 %v27, 4294901760
  %624 = vmatpush1.msra.mxu0 %v623
  %625 = vmatprep.subr.mxu0 0.0
  %v626 = vand.u32 %v28, 4294901760
  %627 = vmatpush1.msra.mxu0 %v626
  %628 = vmatprep.subr.mxu0 0.0
  %v629 = vand.u32 %v29, 4294901760
  %630 = vmatpush1.msra.mxu0 %v629
  %631 = vmatprep.subr.mxu0 0.0
  %v632 = vand.u32 %v30, 4294901760
  %633 = vmatpush1.msra.mxu0 %v632
  %634 = vmatprep.subr.mxu0 0.0
  %635 = vmatpush1.msra.mxu0 0.0
  %636 = vmatprep.subr.mxu0 0.0
  %637 = vmatpush1.msra.mxu0 0.0
  %638 = vmatprep.subr.mxu0 0.0
  %639 = vmatpush1.msra.mxu0 0.0
  %640 = vmatprep.subr.mxu0 0.0
  %641 = vmatpush1.msra.mxu0 0.0
  %642 = vmatprep.subr.mxu0 0.0
  %643 = vmatpush1.msra.mxu0 0.0
  %644 = vmatprep.subr.mxu0 0.0
  %645 = vmatpush1.msra.mxu0 0.0
  %646 = vmatprep.subr.mxu0 0.0
  %647 = vmatpush1.msra.mxu0 0.0
  %648 = vmatprep.subr.mxu0 0.0
  %649 = vmatpush1.msra.mxu0 0.0
  %650 = vmatprep.subr.mxu0 0.0
  %651 = vmatpush1.msra.mxu0 0.0
  %652 = vmatprep.subr.mxu0 0.0
  %653 = vmatpush1.msra.mxu0 0.0
  %654 = vmatprep.subr.mxu0 0.0
  %655 = vmatpush1.msra.mxu0 0.0
  %656 = vmatprep.subr.mxu0 0.0
  %657 = vmatpush1.msra.mxu0 0.0
  %658 = vmatprep.subr.mxu0 0.0
  %659 = vmatpush1.msra.mxu0 0.0
  %660 = vmatprep.subr.mxu0 0.0
  %661 = vmatpush1.msra.mxu0 0.0
  %662 = vmatprep.subr.mxu0 0.0
  %663 = vmatpush1.msra.mxu0 0.0
  %664 = vmatprep.subr.mxu0 0.0
  %665 = vmatpush1.msra.mxu0 0.0
  %666 = vmatprep.mubr.f32.mxu0 0.0
  %v667 = vand.u32 %v14, 4294901760
  %668 = vmatmul.mubr.f32.gmra.mrb[0].mxu0 %v667
  %v669 = vpop.f32.mrb[0].mxu0
  %v670 = vadd.f32 %v583, %v669
  %v671 = vpop.f32.mrb[0].mxu0
  %672 = vdwg.mxu0
  %673 = vst [vmem:[%s3] sm:$0x1] %v670
  // Predicated region
  $region14: #{custom_model_forward.1} parent=0 // pred_check
    _
  $region15: #{custom_model_forward.1} parent=0 // pred_check_branch
    %675 = sbr.rel (0) target = $region17
  $region16: #{custom_model_forward.1} parent=0 // pred_region
    _
  $region17: #{custom_model_forward.1} parent=0 // pred_fallthru
    _
  // Predicated region
  $region18: #{custom_model_forward.1} parent=0 // pred_check
    _
  $region19: #{custom_model_forward.1} parent=0 // pred_check_branch
    %677 = sbr.rel (0) target = $region21
  $region20: #{custom_model_forward.1} parent=0 // pred_region
    _
  $region21: #{custom_model_forward.1} parent=0 // pred_fallthru
    _

</llo_original>
